<compile_context>
chip_gen: v7x
topology: tpu7x:2x2x1
jax: 0.10.0
libtpu: 0.0.40
codegen_flags: <defaults>
</compile_context>

<pallas_src>
import jax
import jax.numpy as jnp
from jax import lax
from jax.experimental import pallas as pl
from jax.experimental.pallas import tpu as pltpu


def _make_kernel(B, TB, D, needs_mask, use_mxu):
    def kernel(margin_ref, a_ref, p_ref, n_ref, out_ref):
        a = a_ref[...]
        p = p_ref[...]
        n = n_ref[...]
        if a.dtype != jnp.float32:  # support bf16 inputs; no-op for f32
            a = a.astype(jnp.float32)
            p = p.astype(jnp.float32)
            n = n.astype(jnp.float32)

        dp = a - p
        dn = a - n
        # Fused reductions: sum_D((a-p)^2 - (a-n)^2) -> one cross-lane (XLU)
        # reduction per tile instead of two, fewer live vregs.
        d = dp * dp - dn * dn

        if use_mxu:
            # Large lane-aligned D: do the row reduction on the (otherwise
            # idle) MXU so the XLU/VPU stay free and the kernel stays DMA-bound.
            ones = jnp.ones((D, 1), jnp.float32)
            per_row = jnp.dot(d, ones, preferred_element_type=jnp.float32)
        else:
            per_row = jnp.sum(d, axis=1, keepdims=True)            # (TB, 1)

        losses = jnp.maximum(per_row + margin_ref[0, 0], 0.0)      # relu

        if needs_mask:
            # Ragged last tile: rows >= B are out-of-bounds garbage -> zero
            # them, otherwise each pad row would contribute relu(margin).
            rows = pl.program_id(0) * TB + lax.broadcasted_iota(
                jnp.int32, (TB, 1), 0)
            losses = jnp.where(rows < B, losses, 0.0)

        # Lane-dense partial-sum slab for this tile (unmasked 128-wide stores).
        out_ref[...] = jnp.full((8, 128), jnp.sum(losses), dtype=jnp.float32)

    return kernel


def _choose_tile_rows(B, D):
    """Rows/tile so 3 double-buffered (TB, D) f32 tiles fit ~24 MiB of VMEM."""
    budget = 24 * 1024 * 1024           # conservative for v7x (64 MiB/TC VMEM)
    tb = budget // (3 * 2 * D * 4)      # 3 inputs x 2 pipeline buffers x f32
    tb = min(tb, 4096)                  # diminishing returns past this
    if tb >= B:
        return B                        # single full-batch tile
    return max(8, (tb // 8) * 8)        # sublane-aligned


def triplet_loss(anchor, positive, negative, margin=1.0, tile_rows=None):
    """Pallas TPU implementation of TripletLoss.forward. Returns scalar f32."""
    assert anchor.shape == positive.shape == negative.shape
    assert anchor.ndim == 2
    B, D = anchor.shape

    TB = _choose_tile_rows(B, D) if tile_rows is None else tile_rows
    num_tiles = pl.cdiv(B, TB)
    needs_mask = (B % TB) != 0
    use_mxu = (D % 128 == 0) and (D >= 256)

    kernel = _make_kernel(B, TB, D, needs_mask, use_mxu)
    margin_arr = jnp.full((1, 1), margin, dtype=jnp.float32)

    partials = pl.pallas_call(
        kernel,
        out_shape=jax.ShapeDtypeStruct((num_tiles * 8, 128), jnp.float32),
        grid=(num_tiles,),
        in_specs=[
            pl.BlockSpec(memory_space=pltpu.MemorySpace.SMEM),   # margin scalar
            pl.BlockSpec((TB, D), lambda i: (i, 0)),             # anchor
            pl.BlockSpec((TB, D), lambda i: (i, 0)),             # positive
            pl.BlockSpec((TB, D), lambda i: (i, 0)),             # negative
        ],
        out_specs=pl.BlockSpec((8, 128), lambda i: (i, 0)),
        compiler_params=pltpu.CompilerParams(
            dimension_semantics=("parallel",),
            vmem_limit_bytes=32 * 1024 * 1024,
        ),
    )(margin_arr, anchor, positive, negative)

    per_tile = partials.reshape(num_tiles, 8, 128)[:, 0, 0]      # one value/tile
    return jnp.sum(per_tile) / jnp.float32(B)


def _reference(a, p, n, margin):
    dp = jnp.sum((a - p) ** 2, axis=1)
    dn = jnp.sum((a - n) ** 2, axis=1)
    return jnp.mean(jnp.maximum(dp - dn + margin, 0.0))


if __name__ == "__main__":
    key = jax.random.PRNGKey(0)

    # Test 1: same small embedding batch as the original module usage.
    B, D = 8, 32
    k1, k2, k3, key = jax.random.split(key, 4)
    anchor = jax.random.normal(k1, (B, D), dtype=jnp.float32)
    positive = jax.random.normal(k2, (B, D), dtype=jnp.float32)
    negative = jax.random.normal(k3, (B, D), dtype=jnp.float32)

    loss = triplet_loss(anchor, positive, negative, margin=1.0)
    jax.block_until_ready(loss)
    ref = _reference(anchor, positive, negative, 1.0)
    assert jnp.allclose(loss, ref, rtol=1e-5, atol=1e-5), (loss, ref)

    # Test 2: force multiple tiles with a ragged last tile (exercises the
    # "parallel" batch tiling + in-kernel row masking path).
    B2, D2 = 24, 32
    k1, k2, k3, key = jax.random.split(key, 4)
    a2 = jax.random.normal(k1, (B2, D2), dtype=jnp.float32)
    p2 = jax.random.normal(k2, (B2, D2), dtype=jnp.float32)
    n2 = jax.random.normal(k3, (B2, D2), dtype=jnp.float32)

    loss2 = triplet_loss(a2, p2, n2, margin=0.5, tile_rows=16)
    jax.block_until_ready(loss2)
    ref2 = _reference(a2, p2, n2, 0.5)
    assert jnp.allclose(loss2, ref2, rtol=1e-5, atol=1e-5), (loss2, ref2)

    print("KERNEL_OK")
</pallas_src>

<mosaic_0001>
module attributes {stable_mosaic.version = 11 : i64} {
  func.func @kernel(%arg0: i32, %arg1: memref<1x1xf32, #tpu.memory_space<smem>>, %arg2: memref<8x32xf32, #tpu.memory_space<vmem>>, %arg3: memref<8x32xf32, #tpu.memory_space<vmem>>, %arg4: memref<8x32xf32, #tpu.memory_space<vmem>>, %arg5: memref<8x128xf32, #tpu.memory_space<vmem>>) attributes {dimension_semantics = [#tpu.dimension_semantics<parallel>], iteration_bounds = array<i64: 1>, scalar_prefetch = 0 : i64, scratch_operands = 0 : i64, tpu.core_type = #tpu.core_type<tc>, window_params = [{transform_indices = @transform_0, window_bounds = array<i64: 1, 1>}, {transform_indices = @transform_1, window_bounds = array<i64: 8, 32>}, {transform_indices = @transform_2, window_bounds = array<i64: 8, 32>}, {transform_indices = @transform_3, window_bounds = array<i64: 8, 32>}, {transform_indices = @transform_4, window_bounds = array<i64: 8, 128>}]} {
    %c0 = arith.constant 0 : index
    %c0_0 = arith.constant 0 : index
    %0 = vector.load %arg2[%c0, %c0_0] : memref<8x32xf32, #tpu.memory_space<vmem>>, vector<8x32xf32>
    %c0_1 = arith.constant 0 : index
    %c0_2 = arith.constant 0 : index
    %1 = vector.load %arg3[%c0_1, %c0_2] : memref<8x32xf32, #tpu.memory_space<vmem>>, vector<8x32xf32>
    %c0_3 = arith.constant 0 : index
    %c0_4 = arith.constant 0 : index
    %2 = vector.load %arg4[%c0_3, %c0_4] : memref<8x32xf32, #tpu.memory_space<vmem>>, vector<8x32xf32>
    %3 = arith.subf %0, %1 : vector<8x32xf32>
    %4 = arith.subf %0, %2 : vector<8x32xf32>
    %5 = arith.mulf %3, %3 : vector<8x32xf32>
    %6 = arith.mulf %4, %4 : vector<8x32xf32>
    %7 = arith.subf %5, %6 : vector<8x32xf32>
    %cst = arith.constant dense<0.000000e+00> : vector<8xf32>
    %8 = vector.multi_reduction <add>, %7, %cst [1] : vector<8x32xf32> to vector<8xf32>
    %9 = vector.shape_cast %8 : vector<8xf32> to vector<8x1xf32>
    %c0_5 = arith.constant 0 : index
    %c0_6 = arith.constant 0 : index
    %10 = memref.load %arg1[%c0_5, %c0_6] : memref<1x1xf32, #tpu.memory_space<smem>>
    %11 = vector.broadcast %10 : f32 to vector<8x1xf32>
    %12 = arith.addf %9, %11 : vector<8x1xf32>
    %cst_7 = arith.constant 0.000000e+00 : f32
    %13 = vector.broadcast %cst_7 : f32 to vector<8x1xf32>
    %14 = arith.maximumf %12, %13 : vector<8x1xf32>
    %15 = vector.shape_cast %14 : vector<8x1xf32> to vector<1x8x1xf32>
    %cst_8 = arith.constant dense<0.000000e+00> : vector<1xf32>
    %16 = vector.multi_reduction <add>, %15, %cst_8 [1, 2] : vector<1x8x1xf32> to vector<1xf32>
    %17 = vector.shape_cast %16 : vector<1xf32> to vector<1x1x1xf32>
    %18 = vector.extract %17[0, 0, 0] : f32 from vector<1x1x1xf32>
    %19 = vector.broadcast %18 : f32 to vector<8x128xf32>
    %c0_9 = arith.constant 0 : index
    %c0_10 = arith.constant 0 : index
    %20 = vector.load %arg5[%c0_9, %c0_10] : memref<8x128xf32, #tpu.memory_space<vmem>>, vector<8x128xf32>
    tpu.vector_store %arg5[%c0_9, %c0_10], %19 {strides = array<i32>} : memref<8x128xf32, #tpu.memory_space<vmem>>, vector<8x128xf32>,
    return
  }
  func.func @transform_0(%arg0: i32) -> (i32, i32) {
    %c0_i32 = arith.constant 0 : i32
    %c0_i32_0 = arith.constant 0 : i32
    %c0_i32_1 = arith.constant 0 : i32
    return %c0_i32, %c0_i32_0 : i32, i32
  }
  func.func @transform_1(%arg0: i32) -> (i32, i32) {
    %c0_i32 = arith.constant 0 : i32
    %c0_i32_0 = arith.constant 0 : i32
    return %arg0, %c0_i32 : i32, i32
  }
  func.func @transform_2(%arg0: i32) -> (i32, i32) {
    %c0_i32 = arith.constant 0 : i32
    %c0_i32_0 = arith.constant 0 : i32
    return %arg0, %c0_i32 : i32, i32
  }
  func.func @transform_3(%arg0: i32) -> (i32, i32) {
    %c0_i32 = arith.constant 0 : i32
    %c0_i32_0 = arith.constant 0 : i32
    return %arg0, %c0_i32 : i32, i32
  }
  func.func @transform_4(%arg0: i32) -> (i32, i32) {
    %c0_i32 = arith.constant 0 : i32
    %c0_i32_0 = arith.constant 0 : i32
    return %arg0, %c0_i32 : i32, i32
  }
}

</mosaic_0001>

<llo_original>
// kernel: tpu_custom_call.1
$region0: #{tpu_custom_call.1}
  #allocation0 [shape = 'u32[]', space=smem, size = 0x4, offset = 0x4, fixed_abs, tag = 'smem constant byte address 0x4 - core index']
  #allocation1 [shape = 'u32[144,128]{1,0:T(1,128)}', space=vmem, size = 0x12000, scoped, tag = 'internal scratch']
  #allocation2 [shape = 'f32[1,1]{1,0:T(1,128)S(6)}', space=smem, size = 0x200, scoped, tag = 'scoped memory for tpu_custom_call.1']
  %s0 = inlined_call_operand.<no memory space> [shape: f32[1,1], index: 0, kind: input, shape index: {}]
  %s1 = inlined_call_operand.hbm [shape: f32[8,32], index: 1, kind: input, shape index: {}]
  %s2 = inlined_call_operand.hbm [shape: f32[8,32], index: 2, kind: input, shape index: {}]
  %s3 = inlined_call_operand.vmem [shape: f32[8,32], index: 3, kind: input, shape index: {}]
  %s4 = inlined_call_operand.hbm [shape: f32[8,128], index: 4, kind: output, shape index: {}]
  %s5 = sld [smem:[#allocation0]]
  $region34: #{tpu_custom_call.1} parent=0
    _
  %s7 = ssub.s32 1, %s5
  %s8 = scalar_select 0, %s7, %s5
  %9 = sst [smem:[#allocation2]] %s0
  $region1: #{tpu_custom_call.1} parent=0
    #allocation3 [shape = 'u8[4096]{0}', space=vmem, size = 0x1000, scoped, tag = 'input window, operand 1, single buffered']
    #allocation4 [shape = 's32[1]{0}', space=sflag, size = 0x4, scoped, tag = 'scoped memory for tpu_custom_call.1']
    #allocation5 [shape = 's32[1]{0}', space=sflag, size = 0x4, scoped, tag = 'scoped memory for tpu_custom_call.1']
    #allocation6 [shape = 'u8[4096]{0}', space=vmem, size = 0x1000, scoped, tag = 'input window, operand 2, single buffered']
    #allocation7 [shape = 's32[1]{0}', space=sflag, size = 0x4, scoped, tag = 'scoped memory for tpu_custom_call.1']
    #allocation8 [shape = 'u8[4096]{0}', space=vmem, size = 0x1000, scoped, tag = 'output window, operand 0, single buffered']
    %10 = vsyncpa [#allocation4], 0
    %11 = vsyncpa [#allocation7], 0
    %12 = vsyncpa [#allocation5], 0
    // Predicated region
    $region2: #{tpu_custom_call.1} parent=1 // pred_check
      _
    $region3: #{tpu_custom_call.1} parent=1 // pred_check_branch
      %14 = sbr.rel (0) target = $region5
    $region4: #{tpu_custom_call.1} parent=1 // pred_region
      _
    $region5: #{tpu_custom_call.1} parent=1 // pred_fallthru
      _
    // Predicated region
    $region6: #{tpu_custom_call.1} parent=1 // pred_check
      _
    $region7: #{tpu_custom_call.1} parent=1 // pred_check_branch
      %16 = sbr.rel (0) target = $region9
    $region8: #{tpu_custom_call.1} parent=1 // pred_region
      %s18 = ssub.s32 128, 128
      %19 = vsyncadd [#allocation4], %s18
      %s21 = sshll.u32 [#allocation3], 4
      %s22 = int_to_ptr.vmem [resolvable:$true] %s21
      %24 = dma.hbm_to_vmem [thread:$0]  %s1, 128, %s22, [#allocation4]
    $region9: #{tpu_custom_call.1} parent=1 // pred_fallthru
      _
    // Predicated region
    $region10: #{tpu_custom_call.1} parent=1 // pred_check
      _
    $region11: #{tpu_custom_call.1} parent=1 // pred_check_branch
      %26 = sbr.rel (0) target = $region13
    $region12: #{tpu_custom_call.1} parent=1 // pred_region
      %s28 = ssub.s32 128, 128
      %29 = vsyncadd [#allocation7], %s28
      %s31 = sshll.u32 [#allocation6], 4
      %s32 = int_to_ptr.vmem [resolvable:$true] %s31
      %34 = dma.hbm_to_vmem [thread:$0]  %s2, 128, %s32, [#allocation7]
    $region13: #{tpu_custom_call.1} parent=1 // pred_fallthru
      _
    // Predicated region
    $region14: #{tpu_custom_call.1} parent=1 // pred_check
      _
    $region15: #{tpu_custom_call.1} parent=1 // pred_check_branch
      %36 = sbr.rel (0) target = $region17
    $region16: #{tpu_custom_call.1} parent=1 // pred_region
      _
    $region17: #{tpu_custom_call.1} parent=1 // pred_fallthru
      _
    // Predicated region
    $region18: #{tpu_custom_call.1} parent=1 // pred_check
      _
    $region19: #{tpu_custom_call.1} parent=1 // pred_check_branch
      %38 = sbr.rel (0) target = $region21
    $region20: #{tpu_custom_call.1} parent=1 // pred_region
      %39 = dma.done [#allocation4], 128
    $region21: #{tpu_custom_call.1} parent=1 // pred_fallthru
      _
    // Predicated region
    $region22: #{tpu_custom_call.1} parent=1 // pred_check
      _
    $region23: #{tpu_custom_call.1} parent=1 // pred_check_branch
      %41 = sbr.rel (0) target = $region25
    $region24: #{tpu_custom_call.1} parent=1 // pred_region
      %42 = dma.done [#allocation7], 128
    $region25: #{tpu_custom_call.1} parent=1 // pred_fallthru
      _
    %v43 = vld [vmem:[#allocation3] sm:$0xff]
    %v44 = vld [vmem:[#allocation6] sm:$0xff]
    %v45 = vld [vmem:[%s3] sm:$0xff]
    %v46 = vsub.f32 %v43, %v44
    %v47 = vsub.f32 %v43, %v45
    %v48 = vmul.f32 %v46, %v46
    %v49 = vmul.f32 %v47, %v47
    %v50 = vsub.f32 %v48, %v49
    %vm51 = vcmask 261120
    %v52 = vsel %vm51, %v50, 0.0
    %53 = vadd.xlane.f32.xlu0 %v52
    %v54 = vpop.xlane.xlu0 %53
    %s55 = sld [smem:[#allocation2]]
    %v56 = vstv %s55
    %v57 = vadd.f32 %v54, %v56
    %v58 = vmax.f32 %v57, 0.0
    %vm59 = vcmask 7168
    %v60 = vsel %vm59, %v58, 0.0
    %61 = vadd.xlane.f32.xlu0 %v60
    %v62 = vpop.xlane.xlu0 %61
    %v63 = vrot.slane %v62, 4
    %v64 = vadd.f32 %v62, %v63
    %v65 = vrot.slane %v64, 2
    %v66 = vadd.f32 %v64, %v65
    %v67 = vrot.slane %v66, 1
    %v68 = vadd.f32 %v66, %v67
    %s69 = vtos %v68
    %v70 = vstv %s69
    %71 = vst [vmem:[#allocation8] sm:$0xff] %v70
    // Predicated region
    $region26: #{tpu_custom_call.1} parent=1 // pred_check
      _
    $region27: #{tpu_custom_call.1} parent=1 // pred_check_branch
      %73 = sbr.rel (0) target = $region29
    $region28: #{tpu_custom_call.1} parent=1 // pred_region
      %s75 = ssub.s32 128, 128
      %76 = vsyncadd [#allocation5], %s75
      %s78 = sshll.u32 [#allocation8], 4
      %s79 = int_to_ptr.vmem [resolvable:$true] %s78
      %81 = dma.vmem_to_hbm [thread:$0]  %s79, 128, %s4, [#allocation5]
    $region29: #{tpu_custom_call.1} parent=1 // pred_fallthru
      _
    // Predicated region
    $region30: #{tpu_custom_call.1} parent=1 // pred_check
      _
    $region31: #{tpu_custom_call.1} parent=1 // pred_check_branch
      %83 = sbr.rel (0) target = $region33
    $region32: #{tpu_custom_call.1} parent=1 // pred_region
      %84 = dma.done [#allocation5], 128
    $region33: #{tpu_custom_call.1} parent=1 // pred_fallthru
      _
    %85 = vsyncpa [#allocation4], 1
    %86 = vsyncpa [#allocation7], 1
    %87 = vsyncpa [#allocation5], 1

</llo_original>
